<compile_context>
chip_gen: v6e
topology: v6e:2x2x1
jax: 0.10.0
libtpu: 0.0.40
codegen_flags: <defaults>
</compile_context>

<pallas_src>
import functools

import jax
import jax.numpy as jnp
from jax.experimental import pallas as pl
from jax.experimental.pallas import tpu as pltpu

_LANE = 128


def _round_up(x, m):
    return (x + m - 1) // m * m


def _actor_mlp_kernel(x_ref, w1_ref, b1_ref, w2_ref, b2_ref, w3_ref, b3_ref,
                      out_ref):
    """Fused 3-layer MLP on one (TILE_B, feat) batch tile.

    Matmuls run in the weights' dtype (bf16 or f32) with f32 accumulation on the
    MXU; bias-add / ReLU / tanh stay in f32 (v5e VPU/EUP have no bf16).
    """
    cdt = w1_ref.dtype

    # Layer 1: Linear + ReLU (state tile cast to compute dtype after the load).
    x = x_ref[...].astype(cdt)
    h1 = jnp.dot(x, w1_ref[...], preferred_element_type=jnp.float32)
    h1 = jnp.maximum(h1 + b1_ref[...], 0.0)          # (1, H) bias broadcasts

    # Layer 2: Linear + ReLU
    h2 = jnp.dot(h1.astype(cdt), w2_ref[...], preferred_element_type=jnp.float32)
    h2 = jnp.maximum(h2 + b2_ref[...], 0.0)

    # Layer 3: Linear + Tanh  (tanh lowers to the EUP slot)
    h3 = jnp.dot(h2.astype(cdt), w3_ref[...], preferred_element_type=jnp.float32)
    out_ref[...] = jnp.tanh(h3 + b3_ref[...]).astype(out_ref.dtype)


def pack_actor_params(w1, b1, w2, b2, w3, b3, *, compute_dtype=jnp.bfloat16):
    """One-time weight packing: cast matmul operands to `compute_dtype` and pad
    the hidden / action feature dims to lane multiples (128).

    Zero-padding is semantics-preserving: padded hidden lanes stay exactly 0
    through ReLU (zero weight cols + zero bias) and padded action lanes are
    sliced off (or ignored) by the caller. obs_dim is NOT padded.
    """
    obs_dim, H = w1.shape
    A = w3.shape[1]
    hid_p = _round_up(H, _LANE)
    act_p = _round_up(A, _LANE)
    cdt = compute_dtype
    f32 = jnp.float32

    w1p = jnp.zeros((obs_dim, hid_p), cdt).at[:, :H].set(w1.astype(cdt))
    w2p = jnp.zeros((hid_p, hid_p), cdt).at[:H, :H].set(w2.astype(cdt))
    w3p = jnp.zeros((hid_p, act_p), cdt).at[:H, :A].set(w3.astype(cdt))
    b1p = jnp.zeros((1, hid_p), f32).at[:, :H].set(b1.reshape(1, -1).astype(f32))
    b2p = jnp.zeros((1, hid_p), f32).at[:, :H].set(b2.reshape(1, -1).astype(f32))
    b3p = jnp.zeros((1, act_p), f32).at[:, :A].set(b3.reshape(1, -1).astype(f32))
    return (w1p, b1p, w2p, b2p, w3p, b3p)


@functools.partial(jax.jit,
                   static_argnames=("action_dim", "tile_b", "unpad_output"))
def actor_forward(state, params, *, action_dim, tile_b=1024, unpad_output=True):
    """ActorNetwork forward via a batch-tiled Pallas kernel.

    state:  (B, obs_dim) float32 (unpadded).
    params: output of `pack_actor_params` (padded/cast once, reused every call).
    returns: (B, action_dim) float32 in [-1, 1]   (or the padded (b_p, 128) slab
             if unpad_output=False, which skips one full-batch HBM pass).
    """
    w1p, b1p, w2p, b2p, w3p, b3p = params
    B, obs_dim = state.shape
    act_p = w3p.shape[1]

    # Batch tile: large enough to amortize the ~0.35us per-grid-step overhead,
    # but never bigger than half the batch (rounded to sublanes) so the
    # "parallel" grid axis has >= 2 steps for v7x's two TensorCores when B allows.
    half_b = _round_up(pl.cdiv(B, 2), 8)
    tb = max(8, min(tile_b, half_b))
    b_p = _round_up(B, tb)
    grid = (b_p // tb,)

    # Pad the batch only (cheap: obs_dim lanes wide). Padded rows compute garbage
    # actions that are sliced off / ignored; rows are independent.
    x = state
    if b_p != B:
        x = jnp.zeros((b_p, obs_dim), state.dtype).at[:B].set(state)

    # Weights/biases: constant index_map -> stay VMEM-resident across the grid.
    const = lambda shape: pl.BlockSpec(shape, lambda i: (0, 0))

    out = pl.pallas_call(
        _actor_mlp_kernel,
        out_shape=jax.ShapeDtypeStruct((b_p, act_p), jnp.float32),
        grid=grid,
        in_specs=[
            pl.BlockSpec((tb, obs_dim), lambda i: (i, 0)),   # state: batch-tiled
            const(w1p.shape), const(b1p.shape),              # layer 1
            const(w2p.shape), const(b2p.shape),              # layer 2
            const(w3p.shape), const(b3p.shape),              # layer 3
        ],
        out_specs=pl.BlockSpec((tb, act_p), lambda i: (i, 0)),
        compiler_params=pltpu.CompilerParams(
            dimension_semantics=("parallel",)),              # megacore on v7x
    )(x, w1p, b1p, w2p, b2p, w3p, b3p)

    if unpad_output:
        return out[:B, :action_dim]
    return out


def init_linear(key, in_dim, out_dim):
    """Deterministic PyTorch-style nn.Linear init: U(-1/sqrt(in), 1/sqrt(in))."""
    kw, kb = jax.random.split(key)
    bound = 1.0 / jnp.sqrt(jnp.float32(in_dim))
    w = jax.random.uniform(kw, (in_dim, out_dim), jnp.float32, -bound, bound)
    b = jax.random.uniform(kb, (1, out_dim), jnp.float32, -bound, bound)
    return w, b


def reference_forward(state, w1, b1, w2, b2, w3, b3):
    h1 = jnp.maximum(state @ w1 + b1, 0.0)
    h2 = jnp.maximum(h1 @ w2 + b2, 0.0)
    return jnp.tanh(h2 @ w3 + b3)


if __name__ == "__main__":
    # Shapes consistent with ActorNetwork(obs_dim, action_dim, hidden_dim=512).
    obs_dim, action_dim, hidden_dim = 16, 4, 512

    key = jax.random.PRNGKey(0)
    k_s1, k_s2, k1, k2, k3 = jax.random.split(key, 5)

    w1, b1 = init_linear(k1, obs_dim, hidden_dim)
    w2, b2 = init_linear(k2, hidden_dim, hidden_dim)
    w3, b3 = init_linear(k3, hidden_dim, action_dim)

    # One-time packing (hoisted out of the per-call forward).
    params_bf16 = jax.tree_util.tree_map(
        jax.block_until_ready,
        pack_actor_params(w1, b1, w2, b2, w3, b3, compute_dtype=jnp.bfloat16))
    params_f32 = jax.tree_util.tree_map(
        jax.block_until_ready,
        pack_actor_params(w1, b1, w2, b2, w3, b3, compute_dtype=jnp.float32))

    # 1) Small per-env-step batch (B=2): partial-tile batch padding, grid=(1,).
    state_small = jax.random.normal(k_s1, (2, obs_dim), jnp.float32)
    ref_small = reference_forward(state_small, w1, b1, w2, b2, w3, b3)
    out_small = jax.block_until_ready(
        actor_forward(state_small, params_bf16, action_dim=action_dim))
    assert out_small.shape == (2, action_dim)
    assert jnp.allclose(out_small, ref_small, atol=3e-2, rtol=3e-2), \
        "bf16 small-batch mismatch vs reference"

    # 2) Larger batch (B=300): >= 2 grid steps on the 'parallel' axis.
    state_big = jax.random.normal(k_s2, (300, obs_dim), jnp.float32)
    ref_big = reference_forward(state_big, w1, b1, w2, b2, w3, b3)
    out_big = jax.block_until_ready(
        actor_forward(state_big, params_bf16, action_dim=action_dim))
    assert out_big.shape == (300, action_dim)
    assert jnp.allclose(out_big, ref_big, atol=3e-2, rtol=3e-2), \
        "bf16 large-batch mismatch vs reference"
    assert bool(jnp.all(jnp.abs(out_big) <= 1.0))

    # 3) f32 matmul-operand path (tighter tolerance; MXU f32 is multi-pass bf16,
    #    so tolerances are slightly looser than XLA-default f32 matmul parity).
    out_f32 = jax.block_until_ready(
        actor_forward(state_big, params_f32, action_dim=action_dim))
    assert jnp.allclose(out_f32, ref_big, atol=5e-3, rtol=5e-3), \
        "f32 mismatch vs reference"

    # 4) Padded-output path (skips the post-kernel un-pad slice): consumer view.
    out_padded = jax.block_until_ready(
        actor_forward(state_big, params_bf16, action_dim=action_dim,
                      unpad_output=False))
    assert out_padded.shape[1] == 128
    assert jnp.allclose(out_padded[:300, :action_dim], out_big,
                        atol=1e-6, rtol=1e-6)

    print("KERNEL_OK")
</pallas_src>

<mosaic_0001>
module attributes {stable_mosaic.version = 11 : i64} {
  func.func @_actor_mlp_kernel(%arg0: i32, %arg1: memref<8x16xf32, #tpu.memory_space<vmem>>, %arg2: memref<16x512xbf16, #tpu.memory_space<vmem>>, %arg3: memref<1x512xf32, #tpu.memory_space<vmem>>, %arg4: memref<512x512xbf16, #tpu.memory_space<vmem>>, %arg5: memref<1x512xf32, #tpu.memory_space<vmem>>, %arg6: memref<512x128xbf16, #tpu.memory_space<vmem>>, %arg7: memref<1x128xf32, #tpu.memory_space<vmem>>, %arg8: memref<8x128xf32, #tpu.memory_space<vmem>>) attributes {dimension_semantics = [#tpu.dimension_semantics<parallel>], iteration_bounds = array<i64: 1>, scalar_prefetch = 0 : i64, scratch_operands = 0 : i64, tpu.core_type = #tpu.core_type<tc>, window_params = [{transform_indices = @transform_0, window_bounds = array<i64: 8, 16>}, {pipeline_mode = #tpu.pipeline_mode<synchronous>, transform_indices = @transform_1, window_bounds = array<i64: 16, 512>}, {pipeline_mode = #tpu.pipeline_mode<synchronous>, transform_indices = @transform_2, window_bounds = array<i64: 1, 512>}, {pipeline_mode = #tpu.pipeline_mode<synchronous>, transform_indices = @transform_3, window_bounds = array<i64: 512, 512>}, {pipeline_mode = #tpu.pipeline_mode<synchronous>, transform_indices = @transform_4, window_bounds = array<i64: 1, 512>}, {pipeline_mode = #tpu.pipeline_mode<synchronous>, transform_indices = @transform_5, window_bounds = array<i64: 512, 128>}, {pipeline_mode = #tpu.pipeline_mode<synchronous>, transform_indices = @transform_6, window_bounds = array<i64: 1, 128>}, {transform_indices = @transform_7, window_bounds = array<i64: 8, 128>}]} {
    %c0 = arith.constant 0 : index
    %c0_0 = arith.constant 0 : index
    %0 = vector.load %arg1[%c0, %c0_0] : memref<8x16xf32, #tpu.memory_space<vmem>>, vector<8x16xf32>
    %1 = arith.truncf %0 : vector<8x16xf32> to vector<8x16xbf16>
    %c0_1 = arith.constant 0 : index
    %c0_2 = arith.constant 0 : index
    %2 = vector.load %arg2[%c0_1, %c0_2] : memref<16x512xbf16, #tpu.memory_space<vmem>>, vector<16x512xbf16>
    %cst = arith.constant dense<0.000000e+00> : vector<8x512xf32>
    %3 = tpu.matmul %1, %2, %cst {dimension_numbers = #tpu.dot_dimension_numbers<[1], [0], [0], [1], [0, 0, 1, 1], [], []>} : vector<8x16xbf16>, vector<16x512xbf16>, vector<8x512xf32> -> vector<8x512xf32>
    %c0_3 = arith.constant 0 : index
    %c0_4 = arith.constant 0 : index
    %4 = vector.load %arg3[%c0_3, %c0_4] : memref<1x512xf32, #tpu.memory_space<vmem>>, vector<1x512xf32>
    %5 = vector.broadcast %4 : vector<1x512xf32> to vector<8x512xf32>
    %6 = arith.addf %3, %5 : vector<8x512xf32>
    %cst_5 = arith.constant 0.000000e+00 : f32
    %7 = vector.broadcast %cst_5 : f32 to vector<8x512xf32>
    %8 = arith.maximumf %6, %7 : vector<8x512xf32>
    %9 = arith.truncf %8 : vector<8x512xf32> to vector<8x512xbf16>
    %c0_6 = arith.constant 0 : index
    %c0_7 = arith.constant 0 : index
    %10 = vector.load %arg4[%c0_6, %c0_7] : memref<512x512xbf16, #tpu.memory_space<vmem>>, vector<512x512xbf16>
    %cst_8 = arith.constant dense<0.000000e+00> : vector<8x512xf32>
    %11 = tpu.matmul %9, %10, %cst_8 {dimension_numbers = #tpu.dot_dimension_numbers<[1], [0], [0], [1], [0, 0, 1, 1], [], []>} : vector<8x512xbf16>, vector<512x512xbf16>, vector<8x512xf32> -> vector<8x512xf32>
    %c0_9 = arith.constant 0 : index
    %c0_10 = arith.constant 0 : index
    %12 = vector.load %arg5[%c0_9, %c0_10] : memref<1x512xf32, #tpu.memory_space<vmem>>, vector<1x512xf32>
    %13 = vector.broadcast %12 : vector<1x512xf32> to vector<8x512xf32>
    %14 = arith.addf %11, %13 : vector<8x512xf32>
    %cst_11 = arith.constant 0.000000e+00 : f32
    %15 = vector.broadcast %cst_11 : f32 to vector<8x512xf32>
    %16 = arith.maximumf %14, %15 : vector<8x512xf32>
    %17 = arith.truncf %16 : vector<8x512xf32> to vector<8x512xbf16>
    %c0_12 = arith.constant 0 : index
    %c0_13 = arith.constant 0 : index
    %18 = vector.load %arg6[%c0_12, %c0_13] : memref<512x128xbf16, #tpu.memory_space<vmem>>, vector<512x128xbf16>
    %cst_14 = arith.constant dense<0.000000e+00> : vector<8x128xf32>
    %19 = tpu.matmul %17, %18, %cst_14 {dimension_numbers = #tpu.dot_dimension_numbers<[1], [0], [0], [1], [0, 0, 1, 1], [], []>} : vector<8x512xbf16>, vector<512x128xbf16>, vector<8x128xf32> -> vector<8x128xf32>
    %c0_15 = arith.constant 0 : index
    %c0_16 = arith.constant 0 : index
    %20 = vector.load %arg7[%c0_15, %c0_16] : memref<1x128xf32, #tpu.memory_space<vmem>>, vector<1x128xf32>
    %21 = vector.broadcast %20 : vector<1x128xf32> to vector<8x128xf32>
    %22 = arith.addf %19, %21 : vector<8x128xf32>
    %23 = math.tanh %22 : vector<8x128xf32>
    %c0_17 = arith.constant 0 : index
    %c0_18 = arith.constant 0 : index
    %24 = vector.load %arg8[%c0_17, %c0_18] : memref<8x128xf32, #tpu.memory_space<vmem>>, vector<8x128xf32>
    tpu.vector_store %arg8[%c0_17, %c0_18], %23 {strides = array<i32>} : memref<8x128xf32, #tpu.memory_space<vmem>>, vector<8x128xf32>,
    return
  }
  func.func @transform_0(%arg0: i32) -> (i32, i32) {
    %c0_i32 = arith.constant 0 : i32
    %c0_i32_0 = arith.constant 0 : i32
    return %arg0, %c0_i32 : i32, i32
  }
  func.func @transform_1(%arg0: i32) -> (i32, i32) {
    %c0_i32 = arith.constant 0 : i32
    %c0_i32_0 = arith.constant 0 : i32
    %c0_i32_1 = arith.constant 0 : i32
    return %c0_i32, %c0_i32_0 : i32, i32
  }
  func.func @transform_2(%arg0: i32) -> (i32, i32) {
    %c0_i32 = arith.constant 0 : i32
    %c0_i32_0 = arith.constant 0 : i32
    %c0_i32_1 = arith.constant 0 : i32
    return %c0_i32, %c0_i32_0 : i32, i32
  }
  func.func @transform_3(%arg0: i32) -> (i32, i32) {
    %c0_i32 = arith.constant 0 : i32
    %c0_i32_0 = arith.constant 0 : i32
    %c0_i32_1 = arith.constant 0 : i32
    return %c0_i32, %c0_i32_0 : i32, i32
  }
  func.func @transform_4(%arg0: i32) -> (i32, i32) {
    %c0_i32 = arith.constant 0 : i32
    %c0_i32_0 = arith.constant 0 : i32
    %c0_i32_1 = arith.constant 0 : i32
    return %c0_i32, %c0_i32_0 : i32, i32
  }
  func.func @transform_5(%arg0: i32) -> (i32, i32) {
    %c0_i32 = arith.constant 0 : i32
    %c0_i32_0 = arith.constant 0 : i32
    %c0_i32_1 = arith.constant 0 : i32
    return %c0_i32, %c0_i32_0 : i32, i32
  }
  func.func @transform_6(%arg0: i32) -> (i32, i32) {
    %c0_i32 = arith.constant 0 : i32
    %c0_i32_0 = arith.constant 0 : i32
    %c0_i32_1 = arith.constant 0 : i32
    return %c0_i32, %c0_i32_0 : i32, i32
  }
  func.func @transform_7(%arg0: i32) -> (i32, i32) {
    %c0_i32 = arith.constant 0 : i32
    %c0_i32_0 = arith.constant 0 : i32
    return %arg0, %c0_i32 : i32, i32
  }
}

</mosaic_0001>

<llo_original>
// kernel: actor_forward.1
$region0: #{actor_forward.1}
  #allocation0 [shape = 'u32[]', space=smem, size = 0x4, offset = 0x4, fixed_abs, tag = 'smem constant byte address 0x4 - core index']
  #allocation1 [shape = 'u32[144,128]{1,0:T(1,128)}', space=vmem, size = 0x12000, scoped, tag = 'internal scratch']
  %s0 = inlined_call_operand.vmem [shape: f32[8,16], index: 0, kind: input, shape index: {}]
  %s1 = inlined_call_operand.hbm [shape: bf16[16,512], index: 1, kind: input, shape index: {}]
  %s2 = inlined_call_operand.vmem [shape: f32[1,512], index: 2, kind: input, shape index: {}]
  %s3 = inlined_call_operand.hbm [shape: bf16[512,512], index: 3, kind: input, shape index: {}]
  %s4 = inlined_call_operand.vmem [shape: f32[1,512], index: 4, kind: input, shape index: {}]
  %s5 = inlined_call_operand.hbm [shape: bf16[512,128], index: 5, kind: input, shape index: {}]
  %s6 = inlined_call_operand.vmem [shape: f32[1,128], index: 6, kind: input, shape index: {}]
  %s7 = inlined_call_operand.vmem [shape: f32[8,128], index: 7, kind: output, shape index: {}]
  %s8 = sld [smem:[#allocation0]]
  $region50: #{actor_forward.1} parent=0
    _
  %s10 = ssub.s32 1, %s8
  %s11 = scalar_select 0, %s10, %s8
  $region1: #{actor_forward.1} parent=0
    #allocation2 [shape = 'u8[16384]{0}', space=vmem, size = 0x4000, scoped, tag = 'input window, operand 1, single buffered']
    #allocation3 [shape = 's32[1]{0}', space=sflag, size = 0x4, scoped, tag = 'scoped memory for actor_forward.1']
    #allocation4 [shape = 'u8[524288]{0}', space=vmem, size = 0x80000, scoped, tag = 'input window, operand 3, single buffered']
    #allocation5 [shape = 's32[1]{0}', space=sflag, size = 0x4, scoped, tag = 'scoped memory for actor_forward.1']
    #allocation6 [shape = 'u8[131072]{0}', space=vmem, size = 0x20000, scoped, tag = 'input window, operand 5, single buffered']
    %12 = vsyncpa [#allocation3], 0
    %13 = vsyncpa [#allocation5], 0
    // Predicated region
    $region2: #{actor_forward.1} parent=1 // pred_check
      _
    $region3: #{actor_forward.1} parent=1 // pred_check_branch
      %15 = sbr.rel (0) target = $region5
    $region4: #{actor_forward.1} parent=1 // pred_region
      _
    $region5: #{actor_forward.1} parent=1 // pred_fallthru
      _
    // Predicated region
    $region6: #{actor_forward.1} parent=1 // pred_check
      _
    $region7: #{actor_forward.1} parent=1 // pred_check_branch
      %17 = sbr.rel (0) target = $region9
    $region8: #{actor_forward.1} parent=1 // pred_region
      %s19 = ssub.s32 512, 512
      %20 = vsyncadd [#allocation3], %s19
      %s21 = sshll.u32 [#allocation2], 4
      %s22 = int_to_ptr.vmem [resolvable:$true] %s21
      %27 = dma.hbm_to_vmem [thread:$0]  %s1, 512, %s22, [#allocation3], 256, 256, 16
    $region9: #{actor_forward.1} parent=1 // pred_fallthru
      _
    // Predicated region
    $region10: #{actor_forward.1} parent=1 // pred_check
      _
    $region11: #{actor_forward.1} parent=1 // pred_check_branch
      %29 = sbr.rel (0) target = $region13
    $region12: #{actor_forward.1} parent=1 // pred_region
      _
    $region13: #{actor_forward.1} parent=1 // pred_fallthru
      _
    // Predicated region
    $region14: #{actor_forward.1} parent=1 // pred_check
      _
    $region15: #{actor_forward.1} parent=1 // pred_check_branch
      %31 = sbr.rel (0) target = $region17
    $region16: #{actor_forward.1} parent=1 // pred_region
      %s33 = ssub.s32 16384, 16384
      %34 = vsyncadd [#allocation5], %s33
      %s35 = sshll.u32 [#allocation4], 4
      %s36 = int_to_ptr.vmem [resolvable:$true] %s35
      %41 = dma.hbm_to_vmem [thread:$0]  %s3, 16384, %s36, [#allocation5], 256, 256, 16
    $region17: #{actor_forward.1} parent=1 // pred_fallthru
      _
    // Predicated region
    $region18: #{actor_forward.1} parent=1 // pred_check
      _
    $region19: #{actor_forward.1} parent=1 // pred_check_branch
      %43 = sbr.rel (0) target = $region21
    $region20: #{actor_forward.1} parent=1 // pred_region
      _
    $region21: #{actor_forward.1} parent=1 // pred_fallthru
      _
    // Predicated region
    $region22: #{actor_forward.1} parent=1 // pred_check
      _
    $region23: #{actor_forward.1} parent=1 // pred_check_branch
      %45 = sbr.rel (0) target = $region25
    $region24: #{actor_forward.1} parent=1 // pred_region
      %s47 = ssub.s32 4096, 4096
      %48 = vsyncadd [#allocation5], %s47
      %s49 = sshll.u32 [#allocation6], 4
      %s50 = int_to_ptr.vmem [resolvable:$true] %s49
      %55 = dma.hbm_to_vmem [thread:$0]  %s5, 4096, %s50, [#allocation5], 64, 64, 4
    $region25: #{actor_forward.1} parent=1 // pred_fallthru
      _
    // Predicated region
    $region26: #{actor_forward.1} parent=1 // pred_check
      _
    $region27: #{actor_forward.1} parent=1 // pred_check_branch
      %57 = sbr.rel (0) target = $region29
    $region28: #{actor_forward.1} parent=1 // pred_region
      _
    $region29: #{actor_forward.1} parent=1 // pred_fallthru
      _
    // Predicated region
    $region30: #{actor_forward.1} parent=1 // pred_check
      _
    $region31: #{actor_forward.1} parent=1 // pred_check_branch
      %59 = sbr.rel (0) target = $region33
    $region32: #{actor_forward.1} parent=1 // pred_region
      %60 = dma.done [#allocation3], 512
    $region33: #{actor_forward.1} parent=1 // pred_fallthru
      _
    // Predicated region
    $region34: #{actor_forward.1} parent=1 // pred_check
      _
    $region35: #{actor_forward.1} parent=1 // pred_check_branch
      %62 = sbr.rel (0) target = $region37
    $region36: #{actor_forward.1} parent=1 // pred_region
      %63 = dma.done [#allocation5], 16384
    $region37: #{actor_forward.1} parent=1 // pred_fallthru
      _
    // Predicated region
    $region38: #{actor_forward.1} parent=1 // pred_check
      _
    $region39: #{actor_forward.1} parent=1 // pred_check_branch
      %65 = sbr.rel (0) target = $region41
    $region40: #{actor_forward.1} parent=1 // pred_region
      %66 = dma.done [#allocation5], 4096
    $region41: #{actor_forward.1} parent=1 // pred_fallthru
      _
    %v68 = vld [vmem:[%s0] sm:$0xff]
    %v69 = vpack.c.bf16 %v68, %v68
    %v70 = vld [vmem:[#allocation2] sm:$0xff]
    %v71 = vld [vmem:[#allocation2 + $0x8] sm:$0xff]
    %v72 = vld [vmem:[#allocation2 + $0x10] sm:$0xff]
    %v73 = vld [vmem:[#allocation2 + $0x18] sm:$0xff]
    %v74 = vld [vmem:[%s2] sm:$0xf]
    %v76 = vlaneseq
    %v77 = vshrl.u32 %v76, 7
    %v78 = vsub.s32 0, %v77
    %v79 = vrot.slane %v74, %v78
    %v80 = vlaneseq
    %v81 = vshrl.u32 %v80, 7
    %v82 = vsub.s32 1, %v81
    %v83 = vrot.slane %v74, %v82
    %v84 = vlaneseq
    %v85 = vshrl.u32 %v84, 7
    %v86 = vsub.s32 2, %v85
    %v87 = vrot.slane %v74, %v86
    %v88 = vlaneseq
    %v89 = vshrl.u32 %v88, 7
    %v90 = vsub.s32 3, %v89
    %v91 = vrot.slane %v74, %v90
    %v100 = vunpack.c.l.b16 %v70
    %v101 = vunpack.c.h.b16 %v70
    %v102 = vunpack.c.l.b16 %v71
    %v103 = vunpack.c.h.b16 %v71
    %v104 = vunpack.c.l.b16 %v72
    %v105 = vunpack.c.h.b16 %v72
    %v106 = vunpack.c.l.b16 %v73
    %v107 = vunpack.c.h.b16 %v73
    %v108 = vpack.c.b16 %v104, %v100
    %v109 = vpack.c.b16 %v105, %v101
    %v110 = vpack.c.b16 %v106, %v102
    %v111 = vpack.c.b16 %v107, %v103
    %vm116 = vcmask 130048
    %v118 = vsel %vm116, %v69, 0
    %120 = vmatprep.subr.bf16.mxu0 0
    %121 = vmatpush1.bf16.msra.mxu0 0
    %122 = vmatprep.subr.bf16.mxu0 0
    %123 = vmatpush1.bf16.msra.mxu0 0
    %124 = vmatprep.subr.bf16.mxu0 0
    %125 = vmatpush1.bf16.msra.mxu0 0
    %126 = vmatprep.subr.bf16.mxu0 0
    %127 = vmatpush1.bf16.msra.mxu0 0
    %128 = vmatprep.subr.bf16.mxu0 0
    %129 = vmatpush1.bf16.msra.mxu0 0
    %130 = vmatprep.subr.bf16.mxu0 0
    %131 = vmatpush1.bf16.msra.mxu0 0
    %132 = vmatprep.subr.bf16.mxu0 0
    %133 = vmatpush1.bf16.msra.mxu0 0
    %134 = vmatprep.subr.bf16.mxu0 %v109
    %135 = vmatpush1.bf16.msra.mxu0 %v108
    %136 = vmatprep.subr.bf16.mxu0 0
    %137 = vmatpush2.bf16.msra.mxu0 0
    %138 = vmatprep.subr.bf16.mxu0 0
    %139 = vmatpush2.bf16.msra.mxu0 0
    %140 = vmatprep.subr.bf16.mxu0 0
    %141 = vmatpush2.bf16.msra.mxu0 0
    %142 = vmatprep.subr.bf16.mxu0 0
    %143 = vmatpush2.bf16.msra.mxu0 0
    %144 = vmatprep.subr.bf16.mxu0 0
    %145 = vmatpush2.bf16.msra.mxu0 0
    %146 = vmatprep.subr.bf16.mxu0 0
    %147 = vmatpush2.bf16.msra.mxu0 0
    %148 = vmatprep.subr.bf16.mxu0 0
    %149 = vmatpush2.bf16.msra.mxu0 0
    %150 = vmatprep.subr.bf16.mxu0 0
    %151 = vmatpush2.bf16.msra.mxu0 0
    %152 = vmatprep.mubr.bf16.mxu0 0
    %153 = vmatmul.mubr.bf16.gmra.mxu0 %v118
    %v154 = vpop.f32.mrf.mxu0
    %v155 = vadd.f32 %v79, %v154
    %v156 = vpop.f32.mrf.mxu0
    %v157 = vadd.f32 %v83, %v156
    %v158 = vpop.f32.mrf.mxu0
    %v159 = vpop.f32.mrf.mxu0
    %160 = vdwg.mxu0
    %161 = vmatprep.subr.bf16.mxu0 0
    %162 = vmatpush1.bf16.msra.mxu0 0
    %163 = vmatprep.subr.bf16.mxu0 0
    %164 = vmatpush1.bf16.msra.mxu0 0
    %165 = vmatprep.subr.bf16.mxu0 0
    %166 = vmatpush1.bf16.msra.mxu0 0
    %167 = vmatprep.subr.bf16.mxu0 0
    %168 = vmatpush1.bf16.msra.mxu0 0
    %169 = vmatprep.subr.bf16.mxu0 0
    %170 = vmatpush1.bf16.msra.mxu0 0
    %171 = vmatprep.subr.bf16.mxu0 0
    %172 = vmatpush1.bf16.msra.mxu0 0
    %173 = vmatprep.subr.bf16.mxu0 0
    %174 = vmatpush1.bf16.msra.mxu0 0
    %175 = vmatprep.subr.bf16.mxu0 %v111
    %176 = vmatpush1.bf16.msra.mxu0 %v110
    %177 = vmatprep.subr.bf16.mxu0 0
    %178 = vmatpush2.bf16.msra.mxu0 0
    %179 = vmatprep.subr.bf16.mxu0 0
    %180 = vmatpush2.bf16.msra.mxu0 0
    %181 = vmatprep.subr.bf16.mxu0 0
    %182 = vmatpush2.bf16.msra.mxu0 0
    %183 = vmatprep.subr.bf16.mxu0 0
    %184 = vmatpush2.bf16.msra.mxu0 0
    %185 = vmatprep.subr.bf16.mxu0 0
    %186 = vmatpush2.bf16.msra.mxu0 0
    %187 = vmatprep.subr.bf16.mxu0 0
    %188 = vmatpush2.bf16.msra.mxu0 0
    %189 = vmatprep.subr.bf16.mxu0 0
    %190 = vmatpush2.bf16.msra.mxu0 0
    %191 = vmatprep.subr.bf16.mxu0 0
    %192 = vmatpush2.bf16.msra.mxu0 0
    %193 = vmatprep.mubr.bf16.mxu0 0
    %194 = vmatmul.mubr.bf16.gmra.mxu0 %v118
    %v195 = vpop.f32.mrf.mxu0
    %v196 = vadd.f32 %v87, %v195
    %v197 = vpop.f32.mrf.mxu0
    %v198 = vadd.f32 %v91, %v197
    %v199 = vpop.f32.mrf.mxu0
    %v200 = vpop.f32.mrf.mxu0
    %201 = vdwg.mxu0
    %v202 = vmax.f32 %v155, 0.0
    %v203 = vmax.f32 %v157, 0.0
    %v204 = vmax.f32 %v196, 0.0
    %v205 = vmax.f32 %v198, 0.0
    %v206 = vpack.c.bf16 %v202, %v202
    %v207 = vpack.c.bf16 %v203, %v203
    %v208 = vpack.c.bf16 %v204, %v204
    %v209 = vpack.c.bf16 %v205, %v205
    %v210 = vld [vmem:[#allocation4] sm:$0xff]
    %v211 = vld [vmem:[#allocation4 + $0x8] sm:$0xff]
    %v212 = vld [vmem:[#allocation4 + $0x10] sm:$0xff]
    %v213 = vld [vmem:[#allocation4 + $0x18] sm:$0xff]
    %v214 = vld [vmem:[#allocation4 + $0x20] sm:$0xff]
    %v215 = vld [vmem:[#allocation4 + $0x28] sm:$0xff]
    %v216 = vld [vmem:[#allocation4 + $0x30] sm:$0xff]
    %v217 = vld [vmem:[#allocation4 + $0x38] sm:$0xff]
    %v218 = vld [vmem:[#allocation4 + $0x40] sm:$0xff]
    %v219 = vld [vmem:[#allocation4 + $0x48] sm:$0xff]
    %v220 = vld [vmem:[#allocation4 + $0x50] sm:$0xff]
    %v221 = vld [vmem:[#allocation4 + $0x58] sm:$0xff]
    %v222 = vld [vmem:[#allocation4 + $0x60] sm:$0xff]
    %v223 = vld [vmem:[#allocation4 + $0x68] sm:$0xff]
    %v224 = vld [vmem:[#allocation4 + $0x70] sm:$0xff]
    %v225 = vld [vmem:[#allocation4 + $0x78] sm:$0xff]
    %v226 = vld [vmem:[#allocation4 + $0x80] sm:$0xff]
    %v227 = vld [vmem:[#allocation4 + $0x88] sm:$0xff]
    %v228 = vld [vmem:[#allocation4 + $0x90] sm:$0xff]
    %v229 = vld [vmem:[#allocation4 + $0x98] sm:$0xff]
    %v230 = vld [vmem:[#allocation4 + $0xa0] sm:$0xff]
    %v231 = vld [vmem:[#allocation4 + $0xa8] sm:$0xff]
    %v232 = vld [vmem:[#allocation4 + $0xb0] sm:$0xff]
    %v233 = vld [vmem:[#allocation4 + $0xb8] sm:$0xff]
    %v234 = vld [vmem:[#allocation4 + $0xc0] sm:$0xff]
    %v235 = vld [vmem:[#allocation4 + $0xc8] sm:$0xff]
    %v236 = vld [vmem:[#allocation4 + $0xd0] sm:$0xff]
    %v237 = vld [vmem:[#allocation4 + $0xd8] sm:$0xff]
    %v238 = vld [vmem:[#allocation4 + $0xe0] sm:$0xff]
    %v239 = vld [vmem:[#allocation4 + $0xe8] sm:$0xff]
    %v240 = vld [vmem:[#allocation4 + $0xf0] sm:$0xff]
    %v241 = vld [vmem:[#allocation4 + $0xf8] sm:$0xff]
    %v242 = vld [vmem:[#allocation4 + $0x100] sm:$0xff]
    %v243 = vld [vmem:[#allocation4 + $0x108] sm:$0xff]
    %v244 = vld [vmem:[#allocation4 + $0x110] sm:$0xff]
    %v245 = vld [vmem:[#allocation4 + $0x118] sm:$0xff]
    %v246 = vld [vmem:[#allocation4 + $0x120] sm:$0xff]
    %v247 = vld [vmem:[#allocation4 + $0x128] sm:$0xff]
    %v248 = vld [vmem:[#allocation4 + $0x130] sm:$0xff]
    %v249 = vld [vmem:[#allocation4 + $0x138] sm:$0xff]
    %v250 = vld [vmem:[#allocation4 + $0x140] sm:$0xff]
    %v251 = vld [vmem:[#allocation4 + $0x148] sm:$0xff]
    %v252 = vld [vmem:[#allocation4 + $0x150] sm:$0xff]
    %v253 = vld [vmem:[#allocation4 + $0x158] sm:$0xff]
    %v254 = vld [vmem:[#allocation4 + $0x160] sm:$0xff]
    %v255 = vld [vmem:[#allocation4 + $0x168] sm:$0xff]
    %v256 = vld [vmem:[#allocation4 + $0x170] sm:$0xff]
    %v257 = vld [vmem:[#allocation4 + $0x178] sm:$0xff]
    %v258 = vld [vmem:[#allocation4 + $0x180] sm:$0xff]
    %v259 = vld [vmem:[#allocation4 + $0x188] sm:$0xff]
    %v260 = vld [vmem:[#allocation4 + $0x190] sm:$0xff]
    %v261 = vld [vmem:[#allocation4 + $0x198] sm:$0xff]
    %v262 = vld [vmem:[#allocation4 + $0x1a0] sm:$0xff]
    %v263 = vld [vmem:[#allocation4 + $0x1a8] sm:$0xff]
    %v264 = vld [vmem:[#allocation4 + $0x1b0] sm:$0xff]
    %v265 = vld [vmem:[#allocation4 + $0x1b8] sm:$0xff]
    %v266 = vld [vmem:[#allocation4 + $0x1c0] sm:$0xff]
    %v267 = vld [vmem:[#allocation4 + $0x1c8] sm:$0xff]
    %v268 = vld [vmem:[#allocation4 + $0x1d0] sm:$0xff]
    %v269 = vld [vmem:[#allocation4 + $0x1d8] sm:$0xff]
    %v270 = vld [vmem:[#allocation4 + $0x1e0] sm:$0xff]
    %v271 = vld [vmem:[#allocation4 + $0x1e8] sm:$0xff]
    %v272 = vld [vmem:[#allocation4 + $0x1f0] sm:$0xff]
    %v273 = vld [vmem:[#allocation4 + $0x1f8] sm:$0xff]
    %v274 = vld [vmem:[#allocation4 + $0x200] sm:$0xff]
    %v275 = vld [vmem:[#allocation4 + $0x208] sm:$0xff]
    %v276 = vld [vmem:[#allocation4 + $0x210] sm:$0xff]
    %v277 = vld [vmem:[#allocation4 + $0x218] sm:$0xff]
    %v278 = vld [vmem:[#allocation4 + $0x220] sm:$0xff]
    %v279 = vld [vmem:[#allocation4 + $0x228] sm:$0xff]
    %v280 = vld [vmem:[#allocation4 + $0x230] sm:$0xff]
    %v281 = vld [vmem:[#allocation4 + $0x238] sm:$0xff]
    %v282 = vld [vmem:[#allocation4 + $0x240] sm:$0xff]
    %v283 = vld [vmem:[#allocation4 + $0x248] sm:$0xff]
    %v284 = vld [vmem:[#allocation4 + $0x250] sm:$0xff]
    %v285 = vld [vmem:[#allocation4 + $0x258] sm:$0xff]
    %v286 = vld [vmem:[#allocation4 + $0x260] sm:$0xff]
    %v287 = vld [vmem:[#allocation4 + $0x268] sm:$0xff]
    %v288 = vld [vmem:[#allocation4 + $0x270] sm:$0xff]
    %v289 = vld [vmem:[#allocation4 + $0x278] sm:$0xff]
    %v290 = vld [vmem:[#allocation4 + $0x280] sm:$0xff]
    %v291 = vld [vmem:[#allocation4 + $0x288] sm:$0xff]
    %v292 = vld [vmem:[#allocation4 + $0x290] sm:$0xff]
    %v293 = vld [vmem:[#allocation4 + $0x298] sm:$0xff]
    %v294 = vld [vmem:[#allocation4 + $0x2a0] sm:$0xff]
    %v295 = vld [vmem:[#allocation4 + $0x2a8] sm:$0xff]
    %v296 = vld [vmem:[#allocation4 + $0x2b0] sm:$0xff]
    %v297 = vld [vmem:[#allocation4 + $0x2b8] sm:$0xff]
    %v298 = vld [vmem:[#allocation4 + $0x2c0] sm:$0xff]
    %v299 = vld [vmem:[#allocation4 + $0x2c8] sm:$0xff]
    %v300 = vld [vmem:[#allocation4 + $0x2d0] sm:$0xff]
    %v301 = vld [vmem:[#allocation4 + $0x2d8] sm:$0xff]
    %v302 = vld [vmem:[#allocation4 + $0x2e0] sm:$0xff]
    %v303 = vld [vmem:[#allocation4 + $0x2e8] sm:$0xff]
    %v304 = vld [vmem:[#allocation4 + $0x2f0] sm:$0xff]
    %v305 = vld [vmem:[#allocation4 + $0x2f8] sm:$0xff]
    %v306 = vld [vmem:[#allocation4 + $0x300] sm:$0xff]
    %v307 = vld [vmem:[#allocation4 + $0x308] sm:$0xff]
    %v308 = vld [vmem:[#allocation4 + $0x310] sm:$0xff]
    %v309 = vld [vmem:[#allocation4 + $0x318] sm:$0xff]
    %v310 = vld [vmem:[#allocation4 + $0x320] sm:$0xff]
    %v311 = vld [vmem:[#allocation4 + $0x328] sm:$0xff]
    %v312 = vld [vmem:[#allocation4 + $0x330] sm:$0xff]
    %v313 = vld [vmem:[#allocation4 + $0x338] sm:$0xff]
    %v314 = vld [vmem:[#allocation4 + $0x340] sm:$0xff]
    %v315 = vld [vmem:[#allocation4 + $0x348] sm:$0xff]
    %v316 = vld [vmem:[#allocation4 + $0x350] sm:$0xff]
    %v317 = vld [vmem:[#allocation4 + $0x358] sm:$0xff]
    %v318 = vld [vmem:[#allocation4 + $0x360] sm:$0xff]
    %v319 = vld [vmem:[#allocation4 + $0x368] sm:$0xff]
    %v320 = vld [vmem:[#allocation4 + $0x370] sm:$0xff]
    %v321 = vld [vmem:[#allocation4 + $0x378] sm:$0xff]
    %v322 = vld [vmem:[#allocation4 + $0x380] sm:$0xff]
    %v323 = vld [vmem:[#allocation4 + $0x388] sm:$0xff]
    %v324 = vld [vmem:[#allocation4 + $0x390] sm:$0xff]
    %v325 = vld [vmem:[#allocation4 + $0x398] sm:$0xff]
    %v326 = vld [vmem:[#allocation4 + $0x3a0] sm:$0xff]
    %v327 = vld [vmem:[#allocation4 + $0x3a8] sm:$0xff]
    %v328 = vld [vmem:[#allocation4 + $0x3b0] sm:$0xff]
    %v329 = vld [vmem:[#allocation4 + $0x3b8] sm:$0xff]
    %v330 = vld [vmem:[#allocation4 + $0x3c0] sm:$0xff]
    %v331 = vld [vmem:[#allocation4 + $0x3c8] sm:$0xff]
    %v332 = vld [vmem:[#allocation4 + $0x3d0] sm:$0xff]
    %v333 = vld [vmem:[#allocation4 + $0x3d8] sm:$0xff]
    %v334 = vld [vmem:[#allocation4 + $0x3e0] sm:$0xff]
    %v335 = vld [vmem:[#allocation4 + $0x3e8] sm:$0xff]
    %v336 = vld [vmem:[#allocation4 + $0x3f0] sm:$0xff]
    %v337 = vld [vmem:[#allocation4 + $0x3f8] sm:$0xff]
    %v338 = vld [vmem:[%s4] sm:$0xf]
    %v340 = vlaneseq
    %v341 = vshrl.u32 %v340, 7
    %v342 = vsub.s32 0, %v341
    %v343 = vrot.slane %v338, %v342
    %v344 = vlaneseq
    %v345 = vshrl.u32 %v344, 7
    %v346 = vsub.s32 1, %v345
    %v347 = vrot.slane %v338, %v346
    %v348 = vlaneseq
    %v349 = vshrl.u32 %v348, 7
    %v350 = vsub.s32 2, %v349
    %v351 = vrot.slane %v338, %v350
    %v352 = vlaneseq
    %v353 = vshrl.u32 %v352, 7
    %v354 = vsub.s32 3, %v353
    %v355 = vrot.slane %v338, %v354
    %v488 = vunpack.c.l.b16 %v210
    %v489 = vunpack.c.h.b16 %v210
    %v490 = vunpack.c.l.b16 %v211
    %v491 = vunpack.c.h.b16 %v211
    %v492 = vunpack.c.l.b16 %v212
    %v493 = vunpack.c.h.b16 %v212
    %v494 = vunpack.c.l.b16 %v213
    %v495 = vunpack.c.h.b16 %v213
    %v496 = vunpack.c.l.b16 %v214
    %v497 = vunpack.c.h.b16 %v214
    %v498 = vunpack.c.l.b16 %v215
    %v499 = vunpack.c.h.b16 %v215
    %v500 = vunpack.c.l.b16 %v216
    %v501 = vunpack.c.h.b16 %v216
    %v502 = vunpack.c.l.b16 %v217
    %v503 = vunpack.c.h.b16 %v217
    %v504 = vunpack.c.l.b16 %v218
    %v505 = vunpack.c.h.b16 %v218
    %v506 = vunpack.c.l.b16 %v219
    %v507 = vunpack.c.h.b16 %v219
    %v508 = vunpack.c.l.b16 %v220
    %v509 = vunpack.c.h.b16 %v220
    %v510 = vunpack.c.l.b16 %v221
    %v511 = vunpack.c.h.b16 %v221
    %v512 = vunpack.c.l.b16 %v222
    %v513 = vunpack.c.h.b16 %v222
    %v514 = vunpack.c.l.b16 %v223
    %v515 = vunpack.c.h.b16 %v223
    %v516 = vunpack.c.l.b16 %v224
    %v517 = vunpack.c.h.b16 %v224
    %v518 = vunpack.c.l.b16 %v225
    %v519 = vunpack.c.h.b16 %v225
    %v520 = vunpack.c.l.b16 %v226
    %v521 = vunpack.c.h.b16 %v226
    %v522 = vunpack.c.l.b16 %v227
    %v523 = vunpack.c.h.b16 %v227
    %v524 = vunpack.c.l.b16 %v228
    %v525 = vunpack.c.h.b16 %v228
    %v526 = vunpack.c.l.b16 %v229
    %v527 = vunpack.c.h.b16 %v229
    %v528 = vunpack.c.l.b16 %v230
    %v529 = vunpack.c.h.b16 %v230
    %v530 = vunpack.c.l.b16 %v231
    %v531 = vunpack.c.h.b16 %v231
    %v532 = vunpack.c.l.b16 %v232
    %v533 = vunpack.c.h.b16 %v232
    %v534 = vunpack.c.l.b16 %v233
    %v535 = vunpack.c.h.b16 %v233
    %v536 = vunpack.c.l.b16 %v234
    %v537 = vunpack.c.h.b16 %v234
    %v538 = vunpack.c.l.b16 %v235
    %v539 = vunpack.c.h.b16 %v235
    %v540 = vunpack.c.l.b16 %v236
    %v541 = vunpack.c.h.b16 %v236
    %v542 = vunpack.c.l.b16 %v237
    %v543 = vunpack.c.h.b16 %v237
    %v544 = vunpack.c.l.b16 %v238
    %v545 = vunpack.c.h.b16 %v238
    %v546 = vunpack.c.l.b16 %v239
    %v547 = vunpack.c.h.b16 %v239
    %v548 = vunpack.c.l.b16 %v240
    %v549 = vunpack.c.h.b16 %v240
    %v550 = vunpack.c.l.b16 %v241
    %v551 = vunpack.c.h.b16 %v241
    %v552 = vunpack.c.l.b16 %v242
    %v553 = vunpack.c.h.b16 %v242
    %v554 = vunpack.c.l.b16 %v243
    %v555 = vunpack.c.h.b16 %v243
    %v556 = vunpack.c.l.b16 %v244
    %v557 = vunpack.c.h.b16 %v244
    %v558 = vunpack.c.l.b16 %v245
    %v559 = vunpack.c.h.b16 %v245
    %v560 = vunpack.c.l.b16 %v246
    %v561 = vunpack.c.h.b16 %v246
    %v562 = vunpack.c.l.b16 %v247
    %v563 = vunpack.c.h.b16 %v247
    %v564 = vunpack.c.l.b16 %v248
    %v565 = vunpack.c.h.b16 %v248
    %v566 = vunpack.c.l.b16 %v249
    %v567 = vunpack.c.h.b16 %v249
    %v568 = vunpack.c.l.b16 %v250
    %v569 = vunpack.c.h.b16 %v250
    %v570 = vunpack.c.l.b16 %v251
    %v571 = vunpack.c.h.b16 %v251
    %v572 = vunpack.c.l.b16 %v252
    %v573 = vunpack.c.h.b16 %v252
    %v574 = vunpack.c.l.b16 %v253
    %v575 = vunpack.c.h.b16 %v253
    %v576 = vunpack.c.l.b16 %v254
    %v577 = vunpack.c.h.b16 %v254
    %v578 = vunpack.c.l.b16 %v255
    %v579 = vunpack.c.h.b16 %v255
    %v580 = vunpack.c.l.b16 %v256
    %v581 = vunpack.c.h.b16 %v256
    %v582 = vunpack.c.l.b16 %v257
    %v583 = vunpack.c.h.b16 %v257
    %v584 = vunpack.c.l.b16 %v258
    %v585 = vunpack.c.h.b16 %v258
    %v586 = vunpack.c.l.b16 %v259
    %v587 = vunpack.c.h.b16 %v259
    %v588 = vunpack.c.l.b16 %v260
    %v589 = vunpack.c.h.b16 %v260
    %v590 = vunpack.c.l.b16 %v261
    %v591 = vunpack.c.h.b16 %v261
    %v592 = vunpack.c.l.b16 %v262
    %v593 = vunpack.c.h.b16 %v262
    %v594 = vunpack.c.l.b16 %v263
    %v595 = vunpack.c.h.b16 %v263
    %v596 = vunpack.c.l.b16 %v264
    %v597 = vunpack.c.h.b16 %v264
    %v598 = vunpack.c.l.b16 %v265
    %v599 = vunpack.c.h.b16 %v265
    %v600 = vunpack.c.l.b16 %v266
    %v601 = vunpack.c.h.b16 %v266
    %v602 = vunpack.c.l.b16 %v267
    %v603 = vunpack.c.h.b16 %v267
    %v604 = vunpack.c.l.b16 %v268
    %v605 = vunpack.c.h.b16 %v268
    %v606 = vunpack.c.l.b16 %v269
    %v607 = vunpack.c.h.b16 %v269
    %v608 = vunpack.c.l.b16 %v270
    %v609 = vunpack.c.h.b16 %v270
    %v610 = vunpack.c.l.b16 %v271
    %v611 = vunpack.c.h.b16 %v271
    %v612 = vunpack.c.l.b16 %v272
    %v613 = vunpack.c.h.b16 %v272
    %v614 = vunpack.c.l.b16 %v273
    %v615 = vunpack.c.h.b16 %v273
    %v616 = vunpack.c.l.b16 %v274
    %v617 = vunpack.c.h.b16 %v274
    %v618 = vunpack.c.l.b16 %v275
    %v619 = vunpack.c.h.b16 %v275
    %v620 = vunpack.c.l.b16 %v276
    %v621 = vunpack.c.h.b16 %v276
    %v622 = vunpack.c.l.b16 %v277
    %v623 = vunpack.c.h.b16 %v277
    %v624 = vunpack.c.l.b16 %v278
    %v625 = vunpack.c.h.b16 %v278
    %v626 = vunpack.c.l.b16 %v279
    %v627 = vunpack.c.h.b16 %v279
    %v628 = vunpack.c.l.b16 %v280
    %v629 = vunpack.c.h.b16 %v280
    %v630 = vunpack.c.l.b16 %v281
    %v631 = vunpack.c.h.b16 %v281
    %v632 = vunpack.c.l.b16 %v282
    %v633 = vunpack.c.h.b16 %v282
    %v634 = vunpack.c.l.b16 %v283
    %v635 = vunpack.c.h.b16 %v283
    %v636 = vunpack.c.l.b16 %v284
    %v637 = vunpack.c.h.b16 %v284
    %v638 = vunpack.c.l.b16 %v285
    %v639 = vunpack.c.h.b16 %v285
    %v640 = vunpack.c.l.b16 %v286
    %v641 = vunpack.c.h.b16 %v286
    %v642 = vunpack.c.l.b16 %v287
    %v643 = vunpack.c.h.b16 %v287
    %v644 = vunpack.c.l.b16 %v288
    %v645 = vunpack.c.h.b16 %v288
    %v646 = vunpack.c.l.b16 %v289
    %v647 = vunpack.c.h.b16 %v289
    %v648 = vunpack.c.l.b16 %v290
    %v649 = vunpack.c.h.b16 %v290
    %v650 = vunpack.c.l.b16 %v291
    %v651 = vunpack.c.h.b16 %v291
    %v652 = vunpack.c.l.b16 %v292
    %v653 = vunpack.c.h.b16 %v292
    %v654 = vunpack.c.l.b16 %v293
    %v655 = vunpack.c.h.b16 %v293
    %v656 = vunpack.c.l.b16 %v294
    %v657 = vunpack.c.h.b16 %v294
    %v658 = vunpack.c.l.b16 %v295
    %v659 = vunpack.c.h.b16 %v295
    %v660 = vunpack.c.l.b16 %v296
    %v661 = vunpack.c.h.b16 %v296
    %v662 = vunpack.c.l.b16 %v297
    %v663 = vunpack.c.h.b16 %v297
    %v664 = vunpack.c.l.b16 %v298
    %v665 = vunpack.c.h.b16 %v298
    %v666 = vunpack.c.l.b16 %v299
    %v667 = vunpack.c.h.b16 %v299
    %v668 = vunpack.c.l.b16 %v300
    %v669 = vunpack.c.h.b16 %v300
    %v670 = vunpack.c.l.b16 %v301
    %v671 = vunpack.c.h.b16 %v301
    %v672 = vunpack.c.l.b16 %v302
    %v673 = vunpack.c.h.b16 %v302
    %v674 = vunpack.c.l.b16 %v303
    %v675 = vunpack.c.h.b16 %v303
    %v676 = vunpack.c.l.b16 %v304
    %v677 = vunpack.c.h.b16 %v304
    %v678 = vunpack.c.l.b16 %v305
    %v679 = vunpack.c.h.b16 %v305
    %v680 = vunpack.c.l.b16 %v306
    %v681 = vunpack.c.h.b16 %v306
    %v682 = vunpack.c.l.b16 %v307
    %v683 = vunpack.c.h.b16 %v307
    %v684 = vunpack.c.l.b16 %v308
    %v685 = vunpack.c.h.b16 %v308
    %v686 = vunpack.c.l.b16 %v309
    %v687 = vunpack.c.h.b16 %v309
    %v688 = vunpack.c.l.b16 %v310
    %v689 = vunpack.c.h.b16 %v310
    %v690 = vunpack.c.l.b16 %v311
    %v691 = vunpack.c.h.b16 %v311
    %v692 = vunpack.c.l.b16 %v312
    %v693 = vunpack.c.h.b16 %v312
    %v694 = vunpack.c.l.b16 %v313
    %v695 = vunpack.c.h.b16 %v313
    %v696 = vunpack.c.l.b16 %v314
    %v697 = vunpack.c.h.b16 %v314
    %v698 = vunpack.c.l.b16 %v315
    %v699 = vunpack.c.h.b16 %v315
    %v700 = vunpack.c.l.b16 %v316
    %v701 = vunpack.c.h.b16 %v316
    %v702 = vunpack.c.l.b16 %v317
    %v703 = vunpack.c.h.b16 %v317
    %v704 = vunpack.c.l.b16 %v318
    %v705 = vunpack.c.h.b16 %v318
    %v706 = vunpack.c.l.b16 %v319
    %v707 = vunpack.c.h.b16 %v319
    %v708 = vunpack.c.l.b16 %v320
    %v709 = vunpack.c.h.b16 %v320
    %v710 = vunpack.c.l.b16 %v321
    %v711 = vunpack.c.h.b16 %v321
    %v712 = vunpack.c.l.b16 %v322
    %v713 = vunpack.c.h.b16 %v322
    %v714 = vunpack.c.l.b16 %v323
    %v715 = vunpack.c.h.b16 %v323
    %v716 = vunpack.c.l.b16 %v324
    %v717 = vunpack.c.h.b16 %v324
    %v718 = vunpack.c.l.b16 %v325
    %v719 = vunpack.c.h.b16 %v325
    %v720 = vunpack.c.l.b16 %v326
    %v721 = vunpack.c.h.b16 %v326
    %v722 = vunpack.c.l.b16 %v327
    %v723 = vunpack.c.h.b16 %v327
    %v724 = vunpack.c.l.b16 %v328
    %v725 = vunpack.c.h.b16 %v328
    %v726 = vunpack.c.l.b16 %v329
    %v727 = vunpack.c.h.b16 %v329
    %v728 = vunpack.c.l.b16 %v330
    %v729 = vunpack.c.h.b16 %v330
    %v730 = vunpack.c.l.b16 %v331
    %v731 = vunpack.c.h.b16 %v331
    %v732 = vunpack.c.l.b16 %v332
    %v733 = vunpack.c.h.b16 %v332
    %v734 = vunpack.c.l.b16 %v333
    %v735 = vunpack.c.h.b16 %v333
    %v736 = vunpack.c.l.b16 %v334
    %v737 = vunpack.c.h.b16 %v334
    %v738 = vunpack.c.l.b16 %v335
    %v739 = vunpack.c.h.b16 %v335
    %v740 = vunpack.c.l.b16 %v336
    %v741 = vunpack.c.h.b16 %v336
    %v742 = vunpack.c.l.b16 %v337
    %v743 = vunpack.c.h.b16 %v337
    %v744 = vpack.c.b16 %v492, %v488
    %v745 = vpack.c.b16 %v493, %v489
    %v746 = vpack.c.b16 %v494, %v490
    %v747 = vpack.c.b16 %v495, %v491
    %v748 = vpack.c.b16 %v500, %v496
    %v749 = vpack.c.b16 %v501, %v497
    %v750 = vpack.c.b16 %v502, %v498
    %v751 = vpack.c.b16 %v503, %v499
    %v752 = vpack.c.b16 %v508, %v504
    %v753 = vpack.c.b16 %v509, %v505
    %v754 = vpack.c.b16 %v510, %v506
    %v755 = vpack.c.b16 %v511, %v507
    %v756 = vpack.c.b16 %v516, %v512
    %v757 = vpack.c.b16 %v517, %v513
    %v758 = vpack.c.b16 %v518, %v514
    %v759 = vpack.c.b16 %v519, %v515
    %v760 = vpack.c.b16 %v524, %v520
    %v761 = vpack.c.b16 %v525, %v521
    %v762 = vpack.c.b16 %v526, %v522
    %v763 = vpack.c.b16 %v527, %v523
    %v764 = vpack.c.b16 %v532, %v528
    %v765 = vpack.c.b16 %v533, %v529
    %v766 = vpack.c.b16 %v534, %v530
    %v767 = vpack.c.b16 %v535, %v531
    %v768 = vpack.c.b16 %v540, %v536
    %v769 = vpack.c.b16 %v541, %v537
    %v770 = vpack.c.b16 %v542, %v538
    %v771 = vpack.c.b16 %v543, %v539
    %v772 = vpack.c.b16 %v548, %v544
    %v773 = vpack.c.b16 %v549, %v545
    %v774 = vpack.c.b16 %v550, %v546
    %v775 = vpack.c.b16 %v551, %v547
    %v776 = vpack.c.b16 %v556, %v552
    %v777 = vpack.c.b16 %v557, %v553
    %v778 = vpack.c.b16 %v558, %v554
    %v779 = vpack.c.b16 %v559, %v555
    %v780 = vpack.c.b16 %v564, %v560
    %v781 = vpack.c.b16 %v565, %v561
    %v782 = vpack.c.b16 %v566, %v562
    %v783 = vpack.c.b16 %v567, %v563
    %v784 = vpack.c.b16 %v572, %v568
    %v785 = vpack.c.b16 %v573, %v569
    %v786 = vpack.c.b16 %v574, %v570
    %v787 = vpack.c.b16 %v575, %v571
    %v788 = vpack.c.b16 %v580, %v576
    %v789 = vpack.c.b16 %v581, %v577
    %v790 = vpack.c.b16 %v582, %v578
    %v791 = vpack.c.b16 %v583, %v579
    %v792 = vpack.c.b16 %v588, %v584
    %v793 = vpack.c.b16 %v589, %v585
    %v794 = vpack.c.b16 %v590, %v586
    %v795 = vpack.c.b16 %v591, %v587
    %v796 = vpack.c.b16 %v596, %v592
    %v797 = vpack.c.b16 %v597, %v593
    %v798 = vpack.c.b16 %v598, %v594
    %v799 = vpack.c.b16 %v599, %v595
    %v800 = vpack.c.b16 %v604, %v600
    %v801 = vpack.c.b16 %v605, %v601
    %v802 = vpack.c.b16 %v606, %v602
    %v803 = vpack.c.b16 %v607, %v603
    %v804 = vpack.c.b16 %v612, %v608
    %v805 = vpack.c.b16 %v613, %v609
    %v806 = vpack.c.b16 %v614, %v610
    %v807 = vpack.c.b16 %v615, %v611
    %v808 = vpack.c.b16 %v620, %v616
    %v809 = vpack.c.b16 %v621, %v617
    %v810 = vpack.c.b16 %v622, %v618
    %v811 = vpack.c.b16 %v623, %v619
    %v812 = vpack.c.b16 %v628, %v624
    %v813 = vpack.c.b16 %v629, %v625
    %v814 = vpack.c.b16 %v630, %v626
    %v815 = vpack.c.b16 %v631, %v627
    %v816 = vpack.c.b16 %v636, %v632
    %v817 = vpack.c.b16 %v637, %v633
    %v818 = vpack.c.b16 %v638, %v634
    %v819 = vpack.c.b16 %v639, %v635
    %v820 = vpack.c.b16 %v644, %v640
    %v821 = vpack.c.b16 %v645, %v641
    %v822 = vpack.c.b16 %v646, %v642
    %v823 = vpack.c.b16 %v647, %v643
    %v824 = vpack.c.b16 %v652, %v648
    %v825 = vpack.c.b16 %v653, %v649
    %v826 = vpack.c.b16 %v654, %v650
    %v827 = vpack.c.b16 %v655, %v651
    %v828 = vpack.c.b16 %v660, %v656
    %v829 = vpack.c.b16 %v661, %v657
    %v830 = vpack.c.b16 %v662, %v658
    %v831 = vpack.c.b16 %v663, %v659
    %v832 = vpack.c.b16 %v668, %v664
    %v833 = vpack.c.b16 %v669, %v665
    %v834 = vpack.c.b16 %v670, %v666
    %v835 = vpack.c.b16 %v671, %v667
    %v836 = vpack.c.b16 %v676, %v672
    %v837 = vpack.c.b16 %v677, %v673
    %v838 = vpack.c.b16 %v678, %v674
    %v839 = vpack.c.b16 %v679, %v675
    %v840 = vpack.c.b16 %v684, %v680
    %v841 = vpack.c.b16 %v685, %v681
    %v842 = vpack.c.b16 %v686, %v682
    %v843 = vpack.c.b16 %v687, %v683
    %v844 = vpack.c.b16 %v692, %v688
    %v845 = vpack.c.b16 %v693, %v689
    %v846 = vpack.c.b16 %v694, %v690
    %v847 = vpack.c.b16 %v695, %v691
    %v848 = vpack.c.b16 %v700, %v696
    %v849 = vpack.c.b16 %v701, %v697
    %v850 = vpack.c.b16 %v702, %v698
    %v851 = vpack.c.b16 %v703, %v699
    %v852 = vpack.c.b16 %v708, %v704
    %v853 = vpack.c.b16 %v709, %v705
    %v854 = vpack.c.b16 %v710, %v706
    %v855 = vpack.c.b16 %v711, %v707
    %v856 = vpack.c.b16 %v716, %v712
    %v857 = vpack.c.b16 %v717, %v713
    %v858 = vpack.c.b16 %v718, %v714
    %v859 = vpack.c.b16 %v719, %v715
    %v860 = vpack.c.b16 %v724, %v720
    %v861 = vpack.c.b16 %v725, %v721
    %v862 = vpack.c.b16 %v726, %v722
    %v863 = vpack.c.b16 %v727, %v723
    %v864 = vpack.c.b16 %v732, %v728
    %v865 = vpack.c.b16 %v733, %v729
    %v866 = vpack.c.b16 %v734, %v730
    %v867 = vpack.c.b16 %v735, %v731
    %v868 = vpack.c.b16 %v740, %v736
    %v869 = vpack.c.b16 %v741, %v737
    %v870 = vpack.c.b16 %v742, %v738
    %v871 = vpack.c.b16 %v743, %v739
    %1000 = vmatprep.subr.bf16.mxu0 %v773
    %1001 = vmatpush1.bf16.msra.mxu0 %v772
    %1002 = vmatprep.subr.bf16.mxu0 %v769
    %1003 = vmatpush1.bf16.msra.mxu0 %v768
    %1004 = vmatprep.subr.bf16.mxu0 %v765
    %1005 = vmatpush1.bf16.msra.mxu0 %v764
    %1006 = vmatprep.subr.bf16.mxu0 %v761
    %1007 = vmatpush1.bf16.msra.mxu0 %v760
    %1008 = vmatprep.subr.bf16.mxu0 %v757
    %1009 = vmatpush1.bf16.msra.mxu0 %v756
    %1010 = vmatprep.subr.bf16.mxu0 %v753
    %1011 = vmatpush1.bf16.msra.mxu0 %v752
    %1012 = vmatprep.subr.bf16.mxu0 %v749
    %1013 = vmatpush1.bf16.msra.mxu0 %v748
    %1014 = vmatprep.subr.bf16.mxu0 %v745
    %1015 = vmatpush1.bf16.msra.mxu0 %v744
    %1016 = vmatprep.subr.bf16.mxu0 %v805
    %1017 = vmatpush2.bf16.msra.mxu0 %v804
    %1018 = vmatprep.subr.bf16.mxu0 %v801
    %1019 = vmatpush2.bf16.msra.mxu0 %v800
    %1020 = vmatprep.subr.bf16.mxu0 %v797
    %1021 = vmatpush2.bf16.msra.mxu0 %v796
    %1022 = vmatprep.subr.bf16.mxu0 %v793
    %1023 = vmatpush2.bf16.msra.mxu0 %v792
    %1024 = vmatprep.subr.bf16.mxu0 %v789
    %1025 = vmatpush2.bf16.msra.mxu0 %v788
    %1026 = vmatprep.subr.bf16.mxu0 %v785
    %1027 = vmatpush2.bf16.msra.mxu0 %v784
    %1028 = vmatprep.subr.bf16.mxu0 %v781
    %1029 = vmatpush2.bf16.msra.mxu0 %v780
    %1030 = vmatprep.subr.bf16.mxu0 %v777
    %1031 = vmatpush2.bf16.msra.mxu0 %v776
    %1032 = vmatprep.mubr.bf16.mxu0 %v207
    %1033 = vmatmul.mubr.bf16.gmra.mxu0 %v206
    %v1034 = vpop.f32.mrf.mxu0
    %v1035 = vadd.f32 %v343, %v1034
    %v1036 = vpop.f32.mrf.mxu0
    %v1037 = vadd.f32 %v347, %v1036
    %v1038 = vpop.f32.mrf.mxu0
    %v1039 = vpop.f32.mrf.mxu0
    %1040 = vdwg.mxu0
    %1041 = vmatprep.subr.bf16.mxu0 %v837
    %1042 = vmatpush1.bf16.msra.mxu0 %v836
    %1043 = vmatprep.subr.bf16.mxu0 %v833
    %1044 = vmatpush1.bf16.msra.mxu0 %v832
    %1045 = vmatprep.subr.bf16.mxu0 %v829
    %1046 = vmatpush1.bf16.msra.mxu0 %v828
    %1047 = vmatprep.subr.bf16.mxu0 %v825
    %1048 = vmatpush1.bf16.msra.mxu0 %v824
    %1049 = vmatprep.subr.bf16.mxu0 %v821
    %1050 = vmatpush1.bf16.msra.mxu0 %v820
    %1051 = vmatprep.subr.bf16.mxu0 %v817
    %1052 = vmatpush1.bf16.msra.mxu0 %v816
    %1053 = vmatprep.subr.bf16.mxu0 %v813
    %1054 = vmatpush1.bf16.msra.mxu0 %v812
    %1055 = vmatprep.subr.bf16.mxu0 %v809
    %1056 = vmatpush1.bf16.msra.mxu0 %v808
    %1057 = vmatprep.subr.bf16.mxu0 %v869
    %1058 = vmatpush2.bf16.msra.mxu0 %v868
    %1059 = vmatprep.subr.bf16.mxu0 %v865
    %1060 = vmatpush2.bf16.msra.mxu0 %v864
    %1061 = vmatprep.subr.bf16.mxu0 %v861
    %1062 = vmatpush2.bf16.msra.mxu0 %v860
    %1063 = vmatprep.subr.bf16.mxu0 %v857
    %1064 = vmatpush2.bf16.msra.mxu0 %v856
    %1065 = vmatprep.subr.bf16.mxu0 %v853
    %1066 = vmatpush2.bf16.msra.mxu0 %v852
    %1067 = vmatprep.subr.bf16.mxu0 %v849
    %1068 = vmatpush2.bf16.msra.mxu0 %v848
    %1069 = vmatprep.subr.bf16.mxu0 %v845
    %1070 = vmatpush2.bf16.msra.mxu0 %v844
    %1071 = vmatprep.subr.bf16.mxu0 %v841
    %1072 = vmatpush2.bf16.msra.mxu0 %v840
    %1073 = vmatprep.mubr.bf16.mxu0 %v209
    %1074 = vmatmul.mubr.bf16.gmra.mxu0 %v208
    %v1075 = vpop.f32.mrf.mxu0
    %v1076 = vadd.f32 %v1035, %v1075
    %v1077 = vpop.f32.mrf.mxu0
    %v1078 = vadd.f32 %v1037, %v1077
    %v1079 = vpop.f32.mrf.mxu0
    %v1080 = vpop.f32.mrf.mxu0
    %1081 = vdwg.mxu0
    %1082 = vmatprep.subr.bf16.mxu0 %v775
    %1083 = vmatpush1.bf16.msra.mxu0 %v774
    %1084 = vmatprep.subr.bf16.mxu0 %v771
    %1085 = vmatpush1.bf16.msra.mxu0 %v770
    %1086 = vmatprep.subr.bf16.mxu0 %v767
    %1087 = vmatpush1.bf16.msra.mxu0 %v766
    %1088 = vmatprep.subr.bf16.mxu0 %v763
    %1089 = vmatpush1.bf16.msra.mxu0 %v762
    %1090 = vmatprep.subr.bf16.mxu0 %v759
    %1091 = vmatpush1.bf16.msra.mxu0 %v758
    %1092 = vmatprep.subr.bf16.mxu0 %v755
    %1093 = vmatpush1.bf16.msra.mxu0 %v754
    %1094 = vmatprep.subr.bf16.mxu0 %v751
    %1095 = vmatpush1.bf16.msra.mxu0 %v750
    %1096 = vmatprep.subr.bf16.mxu0 %v747
    %1097 = vmatpush1.bf16.msra.mxu0 %v746
    %1098 = vmatprep.subr.bf16.mxu0 %v807
    %1099 = vmatpush2.bf16.msra.mxu0 %v806
    %1100 = vmatprep.subr.bf16.mxu0 %v803
    %1101 = vmatpush2.bf16.msra.mxu0 %v802
    %1102 = vmatprep.subr.bf16.mxu0 %v799
    %1103 = vmatpush2.bf16.msra.mxu0 %v798
    %1104 = vmatprep.subr.bf16.mxu0 %v795
    %1105 = vmatpush2.bf16.msra.mxu0 %v794
    %1106 = vmatprep.subr.bf16.mxu0 %v791
    %1107 = vmatpush2.bf16.msra.mxu0 %v790
    %1108 = vmatprep.subr.bf16.mxu0 %v787
    %1109 = vmatpush2.bf16.msra.mxu0 %v786
    %1110 = vmatprep.subr.bf16.mxu0 %v783
    %1111 = vmatpush2.bf16.msra.mxu0 %v782
    %1112 = vmatprep.subr.bf16.mxu0 %v779
    %1113 = vmatpush2.bf16.msra.mxu0 %v778
    %1114 = vmatprep.mubr.bf16.mxu0 %v207
    %1115 = vmatmul.mubr.bf16.gmra.mxu0 %v206
    %v1116 = vpop.f32.mrf.mxu0
    %v1117 = vadd.f32 %v351, %v1116
    %v1118 = vpop.f32.mrf.mxu0
    %v1119 = vadd.f32 %v355, %v1118
    %v1120 = vpop.f32.mrf.mxu0
    %v1121 = vpop.f32.mrf.mxu0
    %1122 = vdwg.mxu0
    %1123 = vmatprep.subr.bf16.mxu0 %v839
    %1124 = vmatpush1.bf16.msra.mxu0 %v838
    %1125 = vmatprep.subr.bf16.mxu0 %v835
    %1126 = vmatpush1.bf16.msra.mxu0 %v834
    %1127 = vmatprep.subr.bf16.mxu0 %v831
    %1128 = vmatpush1.bf16.msra.mxu0 %v830
    %1129 = vmatprep.subr.bf16.mxu0 %v827
    %1130 = vmatpush1.bf16.msra.mxu0 %v826
    %1131 = vmatprep.subr.bf16.mxu0 %v823
    %1132 = vmatpush1.bf16.msra.mxu0 %v822
    %1133 = vmatprep.subr.bf16.mxu0 %v819
    %1134 = vmatpush1.bf16.msra.mxu0 %v818
    %1135 = vmatprep.subr.bf16.mxu0 %v815
    %1136 = vmatpush1.bf16.msra.mxu0 %v814
    %1137 = vmatprep.subr.bf16.mxu0 %v811
    %1138 = vmatpush1.bf16.msra.mxu0 %v810
    %1139 = vmatprep.subr.bf16.mxu0 %v871
    %1140 = vmatpush2.bf16.msra.mxu0 %v870
    %1141 = vmatprep.subr.bf16.mxu0 %v867
    %1142 = vmatpush2.bf16.msra.mxu0 %v866
    %1143 = vmatprep.subr.bf16.mxu0 %v863
    %1144 = vmatpush2.bf16.msra.mxu0 %v862
    %1145 = vmatprep.subr.bf16.mxu0 %v859
    %1146 = vmatpush2.bf16.msra.mxu0 %v858
    %1147 = vmatprep.subr.bf16.mxu0 %v855
    %1148 = vmatpush2.bf16.msra.mxu0 %v854
    %1149 = vmatprep.subr.bf16.mxu0 %v851
    %1150 = vmatpush2.bf16.msra.mxu0 %v850
    %1151 = vmatprep.subr.bf16.mxu0 %v847
    %1152 = vmatpush2.bf16.msra.mxu0 %v846
    %1153 = vmatprep.subr.bf16.mxu0 %v843
    %1154 = vmatpush2.bf16.msra.mxu0 %v842
    %1155 = vmatprep.mubr.bf16.mxu0 %v209
    %1156 = vmatmul.mubr.bf16.gmra.mxu0 %v208
    %v1157 = vpop.f32.mrf.mxu0
    %v1158 = vadd.f32 %v1117, %v1157
    %v1159 = vpop.f32.mrf.mxu0
    %v1160 = vadd.f32 %v1119, %v1159
    %v1161 = vpop.f32.mrf.mxu0
    %v1162 = vpop.f32.mrf.mxu0
    %1163 = vdwg.mxu0
    %v1164 = vmax.f32 %v1076, 0.0
    %v1165 = vmax.f32 %v1078, 0.0
    %v1166 = vmax.f32 %v1158, 0.0
    %v1167 = vmax.f32 %v1160, 0.0
    %v1168 = vpack.c.bf16 %v1164, %v1164
    %v1169 = vpack.c.bf16 %v1165, %v1165
    %v1170 = vpack.c.bf16 %v1166, %v1166
    %v1171 = vpack.c.bf16 %v1167, %v1167
    %v1172 = vld [vmem:[#allocation6] sm:$0xf]
    %v1173 = vld [vmem:[#allocation6 + $0x4] sm:$0xf]
    %v1174 = vld [vmem:[#allocation6 + $0x8] sm:$0xf]
    %v1175 = vld [vmem:[#allocation6 + $0xc] sm:$0xf]
    %v1176 = vld [vmem:[#allocation6 + $0x10] sm:$0xf]
    %v1177 = vld [vmem:[#allocation6 + $0x14] sm:$0xf]
    %v1178 = vld [vmem:[#allocation6 + $0x18] sm:$0xf]
    %v1179 = vld [vmem:[#allocation6 + $0x1c] sm:$0xf]
    %v1180 = vld [vmem:[#allocation6 + $0x20] sm:$0xf]
    %v1181 = vld [vmem:[#allocation6 + $0x24] sm:$0xf]
    %v1182 = vld [vmem:[#allocation6 + $0x28] sm:$0xf]
    %v1183 = vld [vmem:[#allocation6 + $0x2c] sm:$0xf]
    %v1184 = vld [vmem:[#allocation6 + $0x30] sm:$0xf]
    %v1185 = vld [vmem:[#allocation6 + $0x34] sm:$0xf]
    %v1186 = vld [vmem:[#allocation6 + $0x38] sm:$0xf]
    %v1187 = vld [vmem:[#allocation6 + $0x3c] sm:$0xf]
    %v1188 = vld [vmem:[#allocation6 + $0x40] sm:$0xf]
    %v1189 = vld [vmem:[#allocation6 + $0x44] sm:$0xf]
    %v1190 = vld [vmem:[#allocation6 + $0x48] sm:$0xf]
    %v1191 = vld [vmem:[#allocation6 + $0x4c] sm:$0xf]
    %v1192 = vld [vmem:[#allocation6 + $0x50] sm:$0xf]
    %v1193 = vld [vmem:[#allocation6 + $0x54] sm:$0xf]
    %v1194 = vld [vmem:[#allocation6 + $0x58] sm:$0xf]
    %v1195 = vld [vmem:[#allocation6 + $0x5c] sm:$0xf]
    %v1196 = vld [vmem:[#allocation6 + $0x60] sm:$0xf]
    %v1197 = vld [vmem:[#allocation6 + $0x64] sm:$0xf]
    %v1198 = vld [vmem:[#allocation6 + $0x68] sm:$0xf]
    %v1199 = vld [vmem:[#allocation6 + $0x6c] sm:$0xf]
    %v1200 = vld [vmem:[#allocation6 + $0x70] sm:$0xf]
    %v1201 = vld [vmem:[#allocation6 + $0x74] sm:$0xf]
    %v1202 = vld [vmem:[#allocation6 + $0x78] sm:$0xf]
    %v1203 = vld [vmem:[#allocation6 + $0x7c] sm:$0xf]
    %v1204 = vld [vmem:[#allocation6 + $0x80] sm:$0xf]
    %v1205 = vld [vmem:[#allocation6 + $0x84] sm:$0xf]
    %v1206 = vld [vmem:[#allocation6 + $0x88] sm:$0xf]
    %v1207 = vld [vmem:[#allocation6 + $0x8c] sm:$0xf]
    %v1208 = vld [vmem:[#allocation6 + $0x90] sm:$0xf]
    %v1209 = vld [vmem:[#allocation6 + $0x94] sm:$0xf]
    %v1210 = vld [vmem:[#allocation6 + $0x98] sm:$0xf]
    %v1211 = vld [vmem:[#allocation6 + $0x9c] sm:$0xf]
    %v1212 = vld [vmem:[#allocation6 + $0xa0] sm:$0xf]
    %v1213 = vld [vmem:[#allocation6 + $0xa4] sm:$0xf]
    %v1214 = vld [vmem:[#allocation6 + $0xa8] sm:$0xf]
    %v1215 = vld [vmem:[#allocation6 + $0xac] sm:$0xf]
    %v1216 = vld [vmem:[#allocation6 + $0xb0] sm:$0xf]
    %v1217 = vld [vmem:[#allocation6 + $0xb4] sm:$0xf]
    %v1218 = vld [vmem:[#allocation6 + $0xb8] sm:$0xf]
    %v1219 = vld [vmem:[#allocation6 + $0xbc] sm:$0xf]
    %v1220 = vld [vmem:[#allocation6 + $0xc0] sm:$0xf]
    %v1221 = vld [vmem:[#allocation6 + $0xc4] sm:$0xf]
    %v1222 = vld [vmem:[#allocation6 + $0xc8] sm:$0xf]
    %v1223 = vld [vmem:[#allocation6 + $0xcc] sm:$0xf]
    %v1224 = vld [vmem:[#allocation6 + $0xd0] sm:$0xf]
    %v1225 = vld [vmem:[#allocation6 + $0xd4] sm:$0xf]
    %v1226 = vld [vmem:[#allocation6 + $0xd8] sm:$0xf]
    %v1227 = vld [vmem:[#allocation6 + $0xdc] sm:$0xf]
    %v1228 = vld [vmem:[#allocation6 + $0xe0] sm:$0xf]
    %v1229 = vld [vmem:[#allocation6 + $0xe4] sm:$0xf]
    %v1230 = vld [vmem:[#allocation6 + $0xe8] sm:$0xf]
    %v1231 = vld [vmem:[#allocation6 + $0xec] sm:$0xf]
    %v1232 = vld [vmem:[#allocation6 + $0xf0] sm:$0xf]
    %v1233 = vld [vmem:[#allocation6 + $0xf4] sm:$0xf]
    %v1234 = vld [vmem:[#allocation6 + $0xf8] sm:$0xf]
    %v1235 = vld [vmem:[#allocation6 + $0xfc] sm:$0xf]
    %v1236 = vld [vmem:[%s6] sm:$0x1]
    %v1238 = vlaneseq
    %v1239 = vshrl.u32 %v1238, 7
    %v1240 = vsub.s32 0, %v1239
    %v1241 = vrot.slane %v1236, %v1240
    %v1307 = vunpack.c.l.b16 %v1172
    %v1308 = vunpack.c.l.b16 %v1173
    %v1309 = vunpack.c.l.b16 %v1174
    %v1310 = vunpack.c.l.b16 %v1175
    %v1311 = vunpack.c.l.b16 %v1176
    %v1312 = vunpack.c.l.b16 %v1177
    %v1313 = vunpack.c.l.b16 %v1178
    %v1314 = vunpack.c.l.b16 %v1179
    %v1315 = vunpack.c.l.b16 %v1180
    %v1316 = vunpack.c.l.b16 %v1181
    %v1317 = vunpack.c.l.b16 %v1182
    %v1318 = vunpack.c.l.b16 %v1183
    %v1319 = vunpack.c.l.b16 %v1184
    %v1320 = vunpack.c.l.b16 %v1185
    %v1321 = vunpack.c.l.b16 %v1186
    %v1322 = vunpack.c.l.b16 %v1187
    %v1323 = vunpack.c.l.b16 %v1188
    %v1324 = vunpack.c.l.b16 %v1189
    %v1325 = vunpack.c.l.b16 %v1190
    %v1326 = vunpack.c.l.b16 %v1191
    %v1327 = vunpack.c.l.b16 %v1192
    %v1328 = vunpack.c.l.b16 %v1193
    %v1329 = vunpack.c.l.b16 %v1194
    %v1330 = vunpack.c.l.b16 %v1195
    %v1331 = vunpack.c.l.b16 %v1196
    %v1332 = vunpack.c.l.b16 %v1197
    %v1333 = vunpack.c.l.b16 %v1198
    %v1334 = vunpack.c.l.b16 %v1199
    %v1335 = vunpack.c.l.b16 %v1200
    %v1336 = vunpack.c.l.b16 %v1201
    %v1337 = vunpack.c.l.b16 %v1202
    %v1338 = vunpack.c.l.b16 %v1203
    %v1339 = vunpack.c.l.b16 %v1204
    %v1340 = vunpack.c.l.b16 %v1205
    %v1341 = vunpack.c.l.b16 %v1206
    %v1342 = vunpack.c.l.b16 %v1207
    %v1343 = vunpack.c.l.b16 %v1208
    %v1344 = vunpack.c.l.b16 %v1209
    %v1345 = vunpack.c.l.b16 %v1210
    %v1346 = vunpack.c.l.b16 %v1211
    %v1347 = vunpack.c.l.b16 %v1212
    %v1348 = vunpack.c.l.b16 %v1213
    %v1349 = vunpack.c.l.b16 %v1214
    %v1350 = vunpack.c.l.b16 %v1215
    %v1351 = vunpack.c.l.b16 %v1216
    %v1352 = vunpack.c.l.b16 %v1217
    %v1353 = vunpack.c.l.b16 %v1218
    %v1354 = vunpack.c.l.b16 %v1219
    %v1355 = vunpack.c.l.b16 %v1220
    %v1356 = vunpack.c.l.b16 %v1221
    %v1357 = vunpack.c.l.b16 %v1222
    %v1358 = vunpack.c.l.b16 %v1223
    %v1359 = vunpack.c.l.b16 %v1224
    %v1360 = vunpack.c.l.b16 %v1225
    %v1361 = vunpack.c.l.b16 %v1226
    %v1362 = vunpack.c.l.b16 %v1227
    %v1363 = vunpack.c.l.b16 %v1228
    %v1364 = vunpack.c.l.b16 %v1229
    %v1365 = vunpack.c.l.b16 %v1230
    %v1366 = vunpack.c.l.b16 %v1231
    %v1367 = vunpack.c.l.b16 %v1232
    %v1368 = vunpack.c.l.b16 %v1233
    %v1369 = vunpack.c.l.b16 %v1234
    %v1370 = vunpack.c.l.b16 %v1235
    %v1371 = vpack.c.b16 %v1308, %v1307
    %v1372 = vpack.c.b16 %v1310, %v1309
    %v1373 = vpack.c.b16 %v1312, %v1311
    %v1374 = vpack.c.b16 %v1314, %v1313
    %v1375 = vpack.c.b16 %v1316, %v1315
    %v1376 = vpack.c.b16 %v1318, %v1317
    %v1377 = vpack.c.b16 %v1320, %v1319
    %v1378 = vpack.c.b16 %v1322, %v1321
    %v1379 = vpack.c.b16 %v1324, %v1323
    %v1380 = vpack.c.b16 %v1326, %v1325
    %v1381 = vpack.c.b16 %v1328, %v1327
    %v1382 = vpack.c.b16 %v1330, %v1329
    %v1383 = vpack.c.b16 %v1332, %v1331
    %v1384 = vpack.c.b16 %v1334, %v1333
    %v1385 = vpack.c.b16 %v1336, %v1335
    %v1386 = vpack.c.b16 %v1338, %v1337
    %v1387 = vpack.c.b16 %v1340, %v1339
    %v1388 = vpack.c.b16 %v1342, %v1341
    %v1389 = vpack.c.b16 %v1344, %v1343
    %v1390 = vpack.c.b16 %v1346, %v1345
    %v1391 = vpack.c.b16 %v1348, %v1347
    %v1392 = vpack.c.b16 %v1350, %v1349
    %v1393 = vpack.c.b16 %v1352, %v1351
    %v1394 = vpack.c.b16 %v1354, %v1353
    %v1395 = vpack.c.b16 %v1356, %v1355
    %v1396 = vpack.c.b16 %v1358, %v1357
    %v1397 = vpack.c.b16 %v1360, %v1359
    %v1398 = vpack.c.b16 %v1362, %v1361
    %v1399 = vpack.c.b16 %v1364, %v1363
    %v1400 = vpack.c.b16 %v1366, %v1365
    %v1401 = vpack.c.b16 %v1368, %v1367
    %v1402 = vpack.c.b16 %v1370, %v1369
    %1435 = vmatprep.subr.bf16.mxu0 0
    %1436 = vmatpush1.bf16.msra.mxu0 %v1378
    %1437 = vmatprep.subr.bf16.mxu0 0
    %1438 = vmatpush1.bf16.msra.mxu0 %v1377
    %1439 = vmatprep.subr.bf16.mxu0 0
    %1440 = vmatpush1.bf16.msra.mxu0 %v1376
    %1441 = vmatprep.subr.bf16.mxu0 0
    %1442 = vmatpush1.bf16.msra.mxu0 %v1375
    %1443 = vmatprep.subr.bf16.mxu0 0
    %1444 = vmatpush1.bf16.msra.mxu0 %v1374
    %1445 = vmatprep.subr.bf16.mxu0 0
    %1446 = vmatpush1.bf16.msra.mxu0 %v1373
    %1447 = vmatprep.subr.bf16.mxu0 0
    %1448 = vmatpush1.bf16.msra.mxu0 %v1372
    %1449 = vmatprep.subr.bf16.mxu0 0
    %1450 = vmatpush1.bf16.msra.mxu0 %v1371
    %1451 = vmatprep.subr.bf16.mxu0 0
    %1452 = vmatpush2.bf16.msra.mxu0 %v1386
    %1453 = vmatprep.subr.bf16.mxu0 0
    %1454 = vmatpush2.bf16.msra.mxu0 %v1385
    %1455 = vmatprep.subr.bf16.mxu0 0
    %1456 = vmatpush2.bf16.msra.mxu0 %v1384
    %1457 = vmatprep.subr.bf16.mxu0 0
    %1458 = vmatpush2.bf16.msra.mxu0 %v1383
    %1459 = vmatprep.subr.bf16.mxu0 0
    %1460 = vmatpush2.bf16.msra.mxu0 %v1382
    %1461 = vmatprep.subr.bf16.mxu0 0
    %1462 = vmatpush2.bf16.msra.mxu0 %v1381
    %1463 = vmatprep.subr.bf16.mxu0 0
    %1464 = vmatpush2.bf16.msra.mxu0 %v1380
    %1465 = vmatprep.subr.bf16.mxu0 0
    %1466 = vmatpush2.bf16.msra.mxu0 %v1379
    %1467 = vmatprep.mubr.bf16.mxu0 %v1169
    %1468 = vmatmul.mubr.bf16.gmra.mxu0 %v1168
    %v1469 = vpop.f32.mrf.mxu0
    %v1470 = vadd.f32 %v1241, %v1469
    %v1471 = vpop.f32.mrf.mxu0
    %v1472 = vpop.f32.mrf.mxu0
    %v1473 = vpop.f32.mrf.mxu0
    %1474 = vdwg.mxu0
    %1475 = vmatprep.subr.bf16.mxu0 0
    %1476 = vmatpush1.bf16.msra.mxu0 %v1394
    %1477 = vmatprep.subr.bf16.mxu0 0
    %1478 = vmatpush1.bf16.msra.mxu0 %v1393
    %1479 = vmatprep.subr.bf16.mxu0 0
    %1480 = vmatpush1.bf16.msra.mxu0 %v1392
    %1481 = vmatprep.subr.bf16.mxu0 0
    %1482 = vmatpush1.bf16.msra.mxu0 %v1391
    %1483 = vmatprep.subr.bf16.mxu0 0
    %1484 = vmatpush1.bf16.msra.mxu0 %v1390
    %1485 = vmatprep.subr.bf16.mxu0 0
    %1486 = vmatpush1.bf16.msra.mxu0 %v1389
    %1487 = vmatprep.subr.bf16.mxu0 0
    %1488 = vmatpush1.bf16.msra.mxu0 %v1388
    %1489 = vmatprep.subr.bf16.mxu0 0
    %1490 = vmatpush1.bf16.msra.mxu0 %v1387
    %1491 = vmatprep.subr.bf16.mxu0 0
    %1492 = vmatpush2.bf16.msra.mxu0 %v1402
    %1493 = vmatprep.subr.bf16.mxu0 0
    %1494 = vmatpush2.bf16.msra.mxu0 %v1401
    %1495 = vmatprep.subr.bf16.mxu0 0
    %1496 = vmatpush2.bf16.msra.mxu0 %v1400
    %1497 = vmatprep.subr.bf16.mxu0 0
    %1498 = vmatpush2.bf16.msra.mxu0 %v1399
    %1499 = vmatprep.subr.bf16.mxu0 0
    %1500 = vmatpush2.bf16.msra.mxu0 %v1398
    %1501 = vmatprep.subr.bf16.mxu0 0
    %1502 = vmatpush2.bf16.msra.mxu0 %v1397
    %1503 = vmatprep.subr.bf16.mxu0 0
    %1504 = vmatpush2.bf16.msra.mxu0 %v1396
    %1505 = vmatprep.subr.bf16.mxu0 0
    %1506 = vmatpush2.bf16.msra.mxu0 %v1395
    %1507 = vmatprep.mubr.bf16.mxu0 %v1171
    %1508 = vmatmul.mubr.bf16.gmra.mxu0 %v1170
    %v1509 = vpop.f32.mrf.mxu0
    %v1510 = vadd.f32 %v1470, %v1509
    %v1511 = vpop.f32.mrf.mxu0
    %v1512 = vpop.f32.mrf.mxu0
    %v1513 = vpop.f32.mrf.mxu0
    %1514 = vdwg.mxu0
    %v1515 = vtanh.pop %v1510
    %1516 = vst [vmem:[%s7] sm:$0xff] %v1515
    // Predicated region
    $region42: #{actor_forward.1} parent=1 // pred_check
      _
    $region43: #{actor_forward.1} parent=1 // pred_check_branch
      %1518 = sbr.rel (0) target = $region45
    $region44: #{actor_forward.1} parent=1 // pred_region
      _
    $region45: #{actor_forward.1} parent=1 // pred_fallthru
      _
    // Predicated region
    $region46: #{actor_forward.1} parent=1 // pred_check
      _
    $region47: #{actor_forward.1} parent=1 // pred_check_branch
      %1520 = sbr.rel (0) target = $region49
    $region48: #{actor_forward.1} parent=1 // pred_region
      _
    $region49: #{actor_forward.1} parent=1 // pred_fallthru
      _
    %1521 = vsyncpa [#allocation3], 1
    %1522 = vsyncpa [#allocation5], 1

</llo_original>
